<compile_context>
chip_gen: v5e
topology: v5e:2x2
jax: 0.10.0
libtpu: 0.0.40
codegen_flags: <defaults>
</compile_context>

<pallas_src>
import jax
import jax.numpy as jnp
from jax.experimental import pallas as pl
from jax.experimental.pallas import tpu as pltpu


def vanet_kernel(xt_ref, w1t_ref, b1t_ref, wqt_ref, bqt_ref, qt_ref):
    # layer 1 on the MXU: (H, S) @ (S, TB) -> (H, TB); K=S is tiny, MXU pads it.
    h = jnp.dot(w1t_ref[...], xt_ref[...], preferred_element_type=jnp.float32)
    h = jnp.maximum(h + b1t_ref[...], 0.0)                # bias broadcast over lanes
    # folded dueling head: (A, H) @ (H, TB) -> (A, TB); Q directly, lane-dense.
    q = jnp.dot(wqt_ref[...], h, preferred_element_type=jnp.float32) + bqt_ref[...]
    qt_ref[...] = q.astype(qt_ref.dtype)


def fold_params(params):
    """Fold the dueling combine into the head weights and pre-transpose.

    Done once per parameter update (hoisted out of the per-call wrapper).
    Returns (W1^T, b1^T, Wq^T, bq^T) for the batch-on-lanes kernel layout.
    """
    w1, b1, wa, ba, wv, bv = params
    wq = wv + wa - jnp.mean(wa, axis=1, keepdims=True)     # (H, A)
    bq = bv + ba - jnp.mean(ba, axis=1, keepdims=True)     # (1, A)
    return (jnp.asarray(w1.T, jnp.float32),                # (H, S)
            jnp.asarray(b1.T, jnp.float32),                # (H, 1)
            jnp.asarray(wq.T, jnp.float32),                # (A, H)
            jnp.asarray(bq.T, jnp.float32))                # (A, 1)


def vanet_forward(x, folded_params, *, block_b=2048):
    w1t, b1t, wqt, bqt = folded_params
    hidden_dim, state_dim = w1t.shape
    action_dim = wqt.shape[0]
    batch = x.shape[0]

    # Batch lives on the lane axis -> tile must be a multiple of 128 lanes.
    ceil_blocks = (batch + 127) // 128
    max_tb_blocks = max(1, block_b // 128)
    if ceil_blocks >= 2:
        # ensure >=2 grid steps so ("parallel",) shards across v7x's 2 TCs
        max_tb_blocks = min(max_tb_blocks, (ceil_blocks + 1) // 2)
    tb = 128 * max(1, min(max_tb_blocks, ceil_blocks))
    padded_b = ((batch + tb - 1) // tb) * tb

    xt = x.T.astype(jnp.float32)                            # (S, B)
    if padded_b != batch:
        xt = jnp.pad(xt, ((0, 0), (0, padded_b - batch)))   # lane padding only

    qt = pl.pallas_call(
        vanet_kernel,
        out_shape=jax.ShapeDtypeStruct((action_dim, padded_b), jnp.float32),
        grid_spec=pltpu.PrefetchScalarGridSpec(
            num_scalar_prefetch=0,
            grid=(padded_b // tb,),
            in_specs=[
                pl.BlockSpec((state_dim, tb), lambda i: (0, i)),          # x^T tile
                pl.BlockSpec((hidden_dim, state_dim), lambda i: (0, 0)),  # W1^T resident
                pl.BlockSpec((hidden_dim, 1), lambda i: (0, 0)),          # b1^T resident
                pl.BlockSpec((action_dim, hidden_dim), lambda i: (0, 0)), # Wq^T resident
                pl.BlockSpec((action_dim, 1), lambda i: (0, 0)),          # bq^T resident
            ],
            out_specs=pl.BlockSpec((action_dim, tb), lambda i: (0, i)),   # Q^T tile
        ),
        compiler_params=pltpu.CompilerParams(
            dimension_semantics=("parallel",),   # megacore sharding on v7x
        ),
    )(xt, w1t, b1t, wqt, bqt)

    # Drop lane padding (garbage Q for padded rows) and return (batch, A).
    return qt[:, :batch].T


def init_params(key, state_dim, hidden_dim, action_dim):
    """Deterministic synthetic init (uniform, like torch default bound, fixed seed)."""
    ks = jax.random.split(key, 6)

    def lin(kw, kb, fan_in, fan_out):
        bound = 1.0 / jnp.sqrt(fan_in)
        w = jax.random.uniform(kw, (fan_in, fan_out), jnp.float32, -bound, bound)
        b = jax.random.uniform(kb, (1, fan_out), jnp.float32, -bound, bound)
        return w, b

    w1, b1 = lin(ks[0], ks[1], state_dim, hidden_dim)
    wa, ba = lin(ks[2], ks[3], hidden_dim, action_dim)
    wv, bv = lin(ks[4], ks[5], hidden_dim, 1)
    return (w1, b1, wa, ba, wv, bv)


def vanet_reference(x, params):
    w1, b1, wa, ba, wv, bv = params
    h = jnp.maximum(x @ w1 + b1, 0.0)
    a = h @ wa + ba
    v = h @ wv + bv
    return v + a - jnp.mean(a, axis=1, keepdims=True)


if __name__ == "__main__":
    state_dim, hidden_dim, action_dim = 4, 128, 2   # CartPole-v1
    batch = 8

    key = jax.random.PRNGKey(0)
    kx, kp = jax.random.split(key)
    x = jax.random.normal(kx, (batch, state_dim), jnp.float32)
    params = init_params(kp, state_dim, hidden_dim, action_dim)

    folded = fold_params(params)                     # once per parameter update
    fwd = jax.jit(vanet_forward)                     # pad/transpose/slice fuse
    q = jax.block_until_ready(fwd(x, folded))

    q_ref = vanet_reference(x, params)
    assert q.shape == (batch, action_dim)
    # NOTE: the dueling fold reassociates FP ops; well within 1e-5 here.
    assert jnp.allclose(q, q_ref, atol=1e-5, rtol=1e-5), "mismatch vs reference"

    print("KERNEL_OK")
</pallas_src>

<mosaic_0001>
module attributes {stable_mosaic.version = 11 : i64} {
  func.func @vanet_kernel(%arg0: i32, %arg1: memref<4x128xf32, #tpu.memory_space<vmem>>, %arg2: memref<128x4xf32, #tpu.memory_space<vmem>>, %arg3: memref<128x1xf32, #tpu.memory_space<vmem>>, %arg4: memref<2x128xf32, #tpu.memory_space<vmem>>, %arg5: memref<2x1xf32, #tpu.memory_space<vmem>>, %arg6: memref<2x128xf32, #tpu.memory_space<vmem>>) attributes {dimension_semantics = [#tpu.dimension_semantics<parallel>], iteration_bounds = array<i64: 1>, scalar_prefetch = 0 : i64, scratch_operands = 0 : i64, tpu.core_type = #tpu.core_type<tc>, window_params = [{transform_indices = @transform_0, window_bounds = array<i64: 4, 128>}, {pipeline_mode = #tpu.pipeline_mode<synchronous>, transform_indices = @transform_1, window_bounds = array<i64: 128, 4>}, {pipeline_mode = #tpu.pipeline_mode<synchronous>, transform_indices = @transform_2, window_bounds = array<i64: 128, 1>}, {pipeline_mode = #tpu.pipeline_mode<synchronous>, transform_indices = @transform_3, window_bounds = array<i64: 2, 128>}, {pipeline_mode = #tpu.pipeline_mode<synchronous>, transform_indices = @transform_4, window_bounds = array<i64: 2, 1>}, {transform_indices = @transform_5, window_bounds = array<i64: 2, 128>}]} {
    %c0 = arith.constant 0 : index
    %c0_0 = arith.constant 0 : index
    %0 = vector.load %arg2[%c0, %c0_0] : memref<128x4xf32, #tpu.memory_space<vmem>>, vector<128x4xf32>
    %c0_1 = arith.constant 0 : index
    %c0_2 = arith.constant 0 : index
    %1 = vector.load %arg1[%c0_1, %c0_2] : memref<4x128xf32, #tpu.memory_space<vmem>>, vector<4x128xf32>
    %cst = arith.constant dense<0.000000e+00> : vector<128x128xf32>
    %2 = tpu.matmul %0, %1, %cst {dimension_numbers = #tpu.dot_dimension_numbers<[1], [0], [0], [1], [0, 0, 1, 1], [], []>} : vector<128x4xf32>, vector<4x128xf32>, vector<128x128xf32> -> vector<128x128xf32>
    %c0_3 = arith.constant 0 : index
    %c0_4 = arith.constant 0 : index
    %3 = vector.load %arg3[%c0_3, %c0_4] : memref<128x1xf32, #tpu.memory_space<vmem>>, vector<128x1xf32>
    %4 = vector.broadcast %3 : vector<128x1xf32> to vector<128x128xf32>
    %5 = arith.addf %2, %4 : vector<128x128xf32>
    %cst_5 = arith.constant 0.000000e+00 : f32
    %6 = vector.broadcast %cst_5 : f32 to vector<128x128xf32>
    %7 = arith.maximumf %5, %6 : vector<128x128xf32>
    %c0_6 = arith.constant 0 : index
    %c0_7 = arith.constant 0 : index
    %8 = vector.load %arg4[%c0_6, %c0_7] : memref<2x128xf32, #tpu.memory_space<vmem>>, vector<2x128xf32>
    %cst_8 = arith.constant dense<0.000000e+00> : vector<2x128xf32>
    %9 = tpu.matmul %8, %7, %cst_8 {dimension_numbers = #tpu.dot_dimension_numbers<[1], [0], [0], [1], [0, 0, 1, 1], [], []>} : vector<2x128xf32>, vector<128x128xf32>, vector<2x128xf32> -> vector<2x128xf32>
    %c0_9 = arith.constant 0 : index
    %c0_10 = arith.constant 0 : index
    %10 = vector.load %arg5[%c0_9, %c0_10] : memref<2x1xf32, #tpu.memory_space<vmem>>, vector<2x1xf32>
    %11 = vector.broadcast %10 : vector<2x1xf32> to vector<2x128xf32>
    %12 = arith.addf %9, %11 : vector<2x128xf32>
    %c0_11 = arith.constant 0 : index
    %c0_12 = arith.constant 0 : index
    %13 = vector.load %arg6[%c0_11, %c0_12] : memref<2x128xf32, #tpu.memory_space<vmem>>, vector<2x128xf32>
    tpu.vector_store %arg6[%c0_11, %c0_12], %12 {strides = array<i32>} : memref<2x128xf32, #tpu.memory_space<vmem>>, vector<2x128xf32>,
    return
  }
  func.func @transform_0(%arg0: i32) -> (i32, i32) {
    %c0_i32 = arith.constant 0 : i32
    %c0_i32_0 = arith.constant 0 : i32
    return %c0_i32, %arg0 : i32, i32
  }
  func.func @transform_1(%arg0: i32) -> (i32, i32) {
    %c0_i32 = arith.constant 0 : i32
    %c0_i32_0 = arith.constant 0 : i32
    %c0_i32_1 = arith.constant 0 : i32
    return %c0_i32, %c0_i32_0 : i32, i32
  }
  func.func @transform_2(%arg0: i32) -> (i32, i32) {
    %c0_i32 = arith.constant 0 : i32
    %c0_i32_0 = arith.constant 0 : i32
    %c0_i32_1 = arith.constant 0 : i32
    return %c0_i32, %c0_i32_0 : i32, i32
  }
  func.func @transform_3(%arg0: i32) -> (i32, i32) {
    %c0_i32 = arith.constant 0 : i32
    %c0_i32_0 = arith.constant 0 : i32
    %c0_i32_1 = arith.constant 0 : i32
    return %c0_i32, %c0_i32_0 : i32, i32
  }
  func.func @transform_4(%arg0: i32) -> (i32, i32) {
    %c0_i32 = arith.constant 0 : i32
    %c0_i32_0 = arith.constant 0 : i32
    %c0_i32_1 = arith.constant 0 : i32
    return %c0_i32, %c0_i32_0 : i32, i32
  }
  func.func @transform_5(%arg0: i32) -> (i32, i32) {
    %c0_i32 = arith.constant 0 : i32
    %c0_i32_0 = arith.constant 0 : i32
    return %c0_i32, %arg0 : i32, i32
  }
}

</mosaic_0001>

<llo_original>
// kernel: vanet_forward.1
$region0: #{vanet_forward.1}
  #allocation0 [shape = 'u32[]', space=smem, size = 0x4, offset = 0x4, fixed_abs, tag = 'smem constant byte address 0x4 - core index']
  #allocation1 [shape = 'u32[72,128]{1,0:T(1,128)}', space=vmem, size = 0x9000, scoped, tag = 'internal scratch']
  %s0 = inlined_call_operand.vmem [shape: f32[4,128], index: 0, kind: input, shape index: {}]
  %s1 = inlined_call_operand.vmem [shape: f32[128,4], index: 1, kind: input, shape index: {}]
  %s2 = inlined_call_operand.vmem [shape: f32[128,1], index: 2, kind: input, shape index: {}]
  %s3 = inlined_call_operand.vmem [shape: f32[2,128], index: 3, kind: input, shape index: {}]
  %s4 = inlined_call_operand.vmem [shape: f32[2,1], index: 4, kind: input, shape index: {}]
  %s5 = inlined_call_operand.vmem [shape: f32[2,128], index: 5, kind: output, shape index: {}]
  %s6 = sld [smem:[#allocation0]]
  $region30: #{vanet_forward.1} parent=0
    _
  %s8 = ssub.s32 1, %s6
  %s9 = scalar_select 0, %s8, %s6
  // Predicated region
  $region2: #{vanet_forward.1} parent=0 // pred_check
    _
  $region3: #{vanet_forward.1} parent=0 // pred_check_branch
    %11 = sbr.rel (0) target = $region5
  $region4: #{vanet_forward.1} parent=0 // pred_region
    _
  $region5: #{vanet_forward.1} parent=0 // pred_fallthru
    _
  // Predicated region
  $region6: #{vanet_forward.1} parent=0 // pred_check
    _
  $region7: #{vanet_forward.1} parent=0 // pred_check_branch
    %13 = sbr.rel (0) target = $region9
  $region8: #{vanet_forward.1} parent=0 // pred_region
    _
  $region9: #{vanet_forward.1} parent=0 // pred_fallthru
    _
  // Predicated region
  $region10: #{vanet_forward.1} parent=0 // pred_check
    _
  $region11: #{vanet_forward.1} parent=0 // pred_check_branch
    %15 = sbr.rel (0) target = $region13
  $region12: #{vanet_forward.1} parent=0 // pred_region
    _
  $region13: #{vanet_forward.1} parent=0 // pred_fallthru
    _
  // Predicated region
  $region14: #{vanet_forward.1} parent=0 // pred_check
    _
  $region15: #{vanet_forward.1} parent=0 // pred_check_branch
    %17 = sbr.rel (0) target = $region17
  $region16: #{vanet_forward.1} parent=0 // pred_region
    _
  $region17: #{vanet_forward.1} parent=0 // pred_fallthru
    _
  // Predicated region
  $region18: #{vanet_forward.1} parent=0 // pred_check
    _
  $region19: #{vanet_forward.1} parent=0 // pred_check_branch
    %19 = sbr.rel (0) target = $region21
  $region20: #{vanet_forward.1} parent=0 // pred_region
    _
  $region21: #{vanet_forward.1} parent=0 // pred_fallthru
    _
  %v20 = vld [vmem:[%s1] sm:$0xff]
  %v21 = vld [vmem:[%s1 + $0x8] sm:$0xff]
  %v22 = vld [vmem:[%s1 + $0x10] sm:$0xff]
  %v23 = vld [vmem:[%s1 + $0x18] sm:$0xff]
  %v24 = vld [vmem:[%s1 + $0x20] sm:$0xff]
  %v25 = vld [vmem:[%s1 + $0x28] sm:$0xff]
  %v26 = vld [vmem:[%s1 + $0x30] sm:$0xff]
  %v27 = vld [vmem:[%s1 + $0x38] sm:$0xff]
  %v28 = vld [vmem:[%s1 + $0x40] sm:$0xff]
  %v29 = vld [vmem:[%s1 + $0x48] sm:$0xff]
  %v30 = vld [vmem:[%s1 + $0x50] sm:$0xff]
  %v31 = vld [vmem:[%s1 + $0x58] sm:$0xff]
  %v32 = vld [vmem:[%s1 + $0x60] sm:$0xff]
  %v33 = vld [vmem:[%s1 + $0x68] sm:$0xff]
  %v34 = vld [vmem:[%s1 + $0x70] sm:$0xff]
  %v35 = vld [vmem:[%s1 + $0x78] sm:$0xff]
  %v36 = vld [vmem:[%s0] sm:$0xf]
  %v37 = vld [vmem:[%s2] sm:$0xff]
  %v38 = vld [vmem:[%s2 + $0x8] sm:$0xff]
  %v39 = vld [vmem:[%s2 + $0x10] sm:$0xff]
  %v40 = vld [vmem:[%s2 + $0x18] sm:$0xff]
  %v41 = vld [vmem:[%s2 + $0x20] sm:$0xff]
  %v42 = vld [vmem:[%s2 + $0x28] sm:$0xff]
  %v43 = vld [vmem:[%s2 + $0x30] sm:$0xff]
  %v44 = vld [vmem:[%s2 + $0x38] sm:$0xff]
  %v45 = vld [vmem:[%s2 + $0x40] sm:$0xff]
  %v46 = vld [vmem:[%s2 + $0x48] sm:$0xff]
  %v47 = vld [vmem:[%s2 + $0x50] sm:$0xff]
  %v48 = vld [vmem:[%s2 + $0x58] sm:$0xff]
  %v49 = vld [vmem:[%s2 + $0x60] sm:$0xff]
  %v50 = vld [vmem:[%s2 + $0x68] sm:$0xff]
  %v51 = vld [vmem:[%s2 + $0x70] sm:$0xff]
  %v52 = vld [vmem:[%s2 + $0x78] sm:$0xff]
  %54 = vset.pattern.permute.xlu0 0
  %55 = vperm.xlu0 %54, %v37
  %v56 = vpop.permute.xlu0 %55
  %59 = vset.pattern.permute.xlu0 0
  %60 = vperm.xlu0 %59, %v38
  %v61 = vpop.permute.xlu0 %60
  %64 = vset.pattern.permute.xlu0 0
  %65 = vperm.xlu0 %64, %v39
  %v66 = vpop.permute.xlu0 %65
  %69 = vset.pattern.permute.xlu0 0
  %70 = vperm.xlu0 %69, %v40
  %v71 = vpop.permute.xlu0 %70
  %74 = vset.pattern.permute.xlu0 0
  %75 = vperm.xlu0 %74, %v41
  %v76 = vpop.permute.xlu0 %75
  %79 = vset.pattern.permute.xlu0 0
  %80 = vperm.xlu0 %79, %v42
  %v81 = vpop.permute.xlu0 %80
  %84 = vset.pattern.permute.xlu0 0
  %85 = vperm.xlu0 %84, %v43
  %v86 = vpop.permute.xlu0 %85
  %89 = vset.pattern.permute.xlu0 0
  %90 = vperm.xlu0 %89, %v44
  %v91 = vpop.permute.xlu0 %90
  %94 = vset.pattern.permute.xlu0 0
  %95 = vperm.xlu0 %94, %v45
  %v96 = vpop.permute.xlu0 %95
  %99 = vset.pattern.permute.xlu0 0
  %100 = vperm.xlu0 %99, %v46
  %v101 = vpop.permute.xlu0 %100
  %104 = vset.pattern.permute.xlu0 0
  %105 = vperm.xlu0 %104, %v47
  %v106 = vpop.permute.xlu0 %105
  %109 = vset.pattern.permute.xlu0 0
  %110 = vperm.xlu0 %109, %v48
  %v111 = vpop.permute.xlu0 %110
  %114 = vset.pattern.permute.xlu0 0
  %115 = vperm.xlu0 %114, %v49
  %v116 = vpop.permute.xlu0 %115
  %119 = vset.pattern.permute.xlu0 0
  %120 = vperm.xlu0 %119, %v50
  %v121 = vpop.permute.xlu0 %120
  %124 = vset.pattern.permute.xlu0 0
  %125 = vperm.xlu0 %124, %v51
  %v126 = vpop.permute.xlu0 %125
  %129 = vset.pattern.permute.xlu0 0
  %130 = vperm.xlu0 %129, %v52
  %v131 = vpop.permute.xlu0 %130
  %vm133 = vcmask 31744
  %v135 = vsel %vm133, %v20, 0
  %v138 = vsel %vm133, %v21, 0
  %v141 = vsel %vm133, %v22, 0
  %v144 = vsel %vm133, %v23, 0
  %v147 = vsel %vm133, %v24, 0
  %v150 = vsel %vm133, %v25, 0
  %v153 = vsel %vm133, %v26, 0
  %v156 = vsel %vm133, %v27, 0
  %v159 = vsel %vm133, %v28, 0
  %v162 = vsel %vm133, %v29, 0
  %v165 = vsel %vm133, %v30, 0
  %v168 = vsel %vm133, %v31, 0
  %v171 = vsel %vm133, %v32, 0
  %v174 = vsel %vm133, %v33, 0
  %v177 = vsel %vm133, %v34, 0
  %v180 = vsel %vm133, %v35, 0
  %vm182 = vcmask 1043456
  %v184 = vsel %vm182, %v36, 0
  %186 = vmatpush.msra.mxu0 0.0
  %187 = vmatpush.msra.mxu0 0.0
  %188 = vmatpush.msra.mxu0 0.0
  %189 = vmatpush.msra.mxu0 0.0
  %190 = vmatpush.msra.mxu0 0.0
  %191 = vmatpush.msra.mxu0 0.0
  %192 = vmatpush.msra.mxu0 0.0
  %193 = vmatpush.msra.mxu0 0.0
  %194 = vmatpush.msra.mxu0 0.0
  %195 = vmatpush.msra.mxu0 0.0
  %196 = vmatpush.msra.mxu0 0.0
  %197 = vmatpush.msra.mxu0 0.0
  %198 = vmatpush.msra.mxu0 0.0
  %199 = vmatpush.msra.mxu0 0.0
  %200 = vmatpush.msra.mxu0 0.0
  %201 = vmatpush.msra.mxu0 %v184
  %202 = vmatmul.f32.gmra.mxu0 %v135
  %v203 = vpop.f32.mrf.mxu0
  %v204 = vadd.f32 %v56, %v203
  %205 = vmatmul.f32.gmra.mxu0 %v138
  %v206 = vpop.f32.mrf.mxu0
  %v207 = vadd.f32 %v61, %v206
  %208 = vmatmul.f32.gmra.mxu0 %v141
  %v209 = vpop.f32.mrf.mxu0
  %v210 = vadd.f32 %v66, %v209
  %211 = vmatmul.f32.gmra.mxu0 %v144
  %v212 = vpop.f32.mrf.mxu0
  %v213 = vadd.f32 %v71, %v212
  %214 = vmatmul.f32.gmra.mxu0 %v147
  %v215 = vpop.f32.mrf.mxu0
  %v216 = vadd.f32 %v76, %v215
  %217 = vmatmul.f32.gmra.mxu0 %v150
  %v218 = vpop.f32.mrf.mxu0
  %v219 = vadd.f32 %v81, %v218
  %220 = vmatmul.f32.gmra.mxu0 %v153
  %v221 = vpop.f32.mrf.mxu0
  %v222 = vadd.f32 %v86, %v221
  %223 = vmatmul.f32.gmra.mxu0 %v156
  %v224 = vpop.f32.mrf.mxu0
  %v225 = vadd.f32 %v91, %v224
  %226 = vmatmul.f32.gmra.mxu0 %v159
  %v227 = vpop.f32.mrf.mxu0
  %v228 = vadd.f32 %v96, %v227
  %229 = vmatmul.f32.gmra.mxu0 %v162
  %v230 = vpop.f32.mrf.mxu0
  %v231 = vadd.f32 %v101, %v230
  %232 = vmatmul.f32.gmra.mxu0 %v165
  %v233 = vpop.f32.mrf.mxu0
  %v234 = vadd.f32 %v106, %v233
  %235 = vmatmul.f32.gmra.mxu0 %v168
  %v236 = vpop.f32.mrf.mxu0
  %v237 = vadd.f32 %v111, %v236
  %238 = vmatmul.f32.gmra.mxu0 %v171
  %v239 = vpop.f32.mrf.mxu0
  %v240 = vadd.f32 %v116, %v239
  %241 = vmatmul.f32.gmra.mxu0 %v174
  %v242 = vpop.f32.mrf.mxu0
  %v243 = vadd.f32 %v121, %v242
  %244 = vmatmul.f32.gmra.mxu0 %v177
  %v245 = vpop.f32.mrf.mxu0
  %v246 = vadd.f32 %v126, %v245
  %247 = vmatmul.f32.gmra.mxu0 %v180
  %v248 = vpop.f32.mrf.mxu0
  %v249 = vadd.f32 %v131, %v248
  %250 = vdwg.mxu0
  %v251 = vmax.f32 %v204, 0.0
  %v252 = vmax.f32 %v207, 0.0
  %v253 = vmax.f32 %v210, 0.0
  %v254 = vmax.f32 %v213, 0.0
  %v255 = vmax.f32 %v216, 0.0
  %v256 = vmax.f32 %v219, 0.0
  %v257 = vmax.f32 %v222, 0.0
  %v258 = vmax.f32 %v225, 0.0
  %v259 = vmax.f32 %v228, 0.0
  %v260 = vmax.f32 %v231, 0.0
  %v261 = vmax.f32 %v234, 0.0
  %v262 = vmax.f32 %v237, 0.0
  %v263 = vmax.f32 %v240, 0.0
  %v264 = vmax.f32 %v243, 0.0
  %v265 = vmax.f32 %v246, 0.0
  %v266 = vmax.f32 %v249, 0.0
  %v267 = vld [vmem:[%s3] sm:$0x3]
  %v268 = vld [vmem:[%s4] sm:$0x3]
  %270 = vset.pattern.permute.xlu0 0
  %271 = vperm.xlu0 %270, %v268
  %v272 = vpop.permute.xlu0 %271
  %274 = vmatpush.msra.mxu0 %v266
  %275 = vmatpush.msra.mxu0 %v265
  %276 = vmatpush.msra.mxu0 %v264
  %277 = vmatpush.msra.mxu0 %v263
  %278 = vmatpush.msra.mxu0 %v262
  %279 = vmatpush.msra.mxu0 %v261
  %280 = vmatpush.msra.mxu0 %v260
  %281 = vmatpush.msra.mxu0 %v259
  %282 = vmatpush.msra.mxu0 %v258
  %283 = vmatpush.msra.mxu0 %v257
  %284 = vmatpush.msra.mxu0 %v256
  %285 = vmatpush.msra.mxu0 %v255
  %286 = vmatpush.msra.mxu0 %v254
  %287 = vmatpush.msra.mxu0 %v253
  %288 = vmatpush.msra.mxu0 %v252
  %289 = vmatpush.msra.mxu0 %v251
  %290 = vmatmul.f32.gmra.mxu0 %v267
  %v291 = vpop.f32.mrf.mxu0
  %v292 = vadd.f32 %v272, %v291
  %293 = vdwg.mxu0
  %294 = vst [vmem:[%s5] sm:$0x3] %v292
  // Predicated region
  $region22: #{vanet_forward.1} parent=0 // pred_check
    _
  $region23: #{vanet_forward.1} parent=0 // pred_check_branch
    %296 = sbr.rel (0) target = $region25
  $region24: #{vanet_forward.1} parent=0 // pred_region
    _
  $region25: #{vanet_forward.1} parent=0 // pred_fallthru
    _
  // Predicated region
  $region26: #{vanet_forward.1} parent=0 // pred_check
    _
  $region27: #{vanet_forward.1} parent=0 // pred_check_branch
    %298 = sbr.rel (0) target = $region29
  $region28: #{vanet_forward.1} parent=0 // pred_region
    _
  $region29: #{vanet_forward.1} parent=0 // pred_fallthru
    _

</llo_original>
